<compile_context>
chip_gen: v5e
topology: v5e:2x2
jax: 0.10.0
libtpu: 0.0.40
codegen_flags: <defaults>
</compile_context>

<pallas_src>
import functools

import jax
import jax.numpy as jnp
from jax.experimental import pallas as pl
from jax.experimental.pallas import tpu as pltpu


def _aa_embed_kernel(tok_ref, tbl_ref, pos_ref, out_ref, *, vocab, pack):
    # tok_ref: (1, R, 1)   int32 -- PACK token ids packed one byte each into one int32
    # tbl_ref: (C, 128)    f32   -- block-diagonal packed embedding table (PACK segments)
    # pos_ref: (R, 128)    f32   -- lane-packed positional rows for this tile
    # out_ref: (1, R, 128) f32   -- lane-dense packed output rows
    r = pos_ref.shape[0]
    c = tbl_ref.shape[0]

    tok = tok_ref[0]                                              # (R, 1) packed ids
    col = jax.lax.broadcasted_iota(jnp.int32, (r, c), 1)          # (R, C)

    onehot = None
    for p in range(pack):                                         # unpack + select
        ids = (tok >> (8 * p)) & 0xFF                             # (R, 1)
        m = col == (p * vocab + ids)
        onehot = m if onehot is None else (onehot | m)

    # Small fixed-K MXU gather (exact: 0/1 x f32); pos add is a cheap VPU op.
    emb = jnp.dot(onehot.astype(jnp.float32), tbl_ref[...],
                  preferred_element_type=jnp.float32)
    out_ref[0] = emb + pos_ref[...]


def make_positional_encoding(d_model: int, max_len: int) -> jnp.ndarray:
    # Mirrors PositionalEncoding.__init__ exactly.
    pos = jnp.arange(0, max_len, dtype=jnp.float32)[:, None]            # (max_len, 1)
    _2i = jnp.arange(0, d_model, 2, dtype=jnp.float32)                  # (d_model//2,)
    angle = pos / jnp.power(10000.0, _2i / d_model)                     # (max_len, d_model//2)
    enc = jnp.zeros((max_len, d_model), dtype=jnp.float32)
    enc = enc.at[:, 0::2].set(jnp.sin(angle))
    enc = enc.at[:, 1::2].set(jnp.cos(angle))
    return enc


def make_embedding_table(key, aa_size: int, aa_dims: int, pad_token_id: int) -> jnp.ndarray:
    # nn.Embedding default init ~ N(0, 1), padding_idx row zeroed.
    tbl = jax.random.normal(key, (aa_size, aa_dims), dtype=jnp.float32)
    tbl = tbl.at[pad_token_id, :].set(0.0)
    return tbl


def _round_up(x: int, m: int) -> int:
    return (x + m - 1) // m * m


def _choose_tile_rows(pos_rows: int, batch: int, max_tile_rows: int) -> int:
    # tile_rows must divide pos_rows (no ragged tiles) and be a multiple of 8
    # (or equal the full extent) to satisfy the (8, 128) block constraint.
    cands = set()
    if pos_rows <= max_tile_rows:
        cands.add(pos_rows)                      # full extent always legal
    d = 8
    while d <= min(pos_rows, max_tile_rows):
        if pos_rows % d == 0:
            cands.add(d)
        d += 8
    if not cands:
        cands = {pos_rows}                       # degenerate fallback
    cands = sorted(cands)
    best = cands[-1]
    # Prefer >= 2 total grid steps so the "parallel" axes can shard across 2 TCs (v7x).
    if batch * (pos_rows // best) < 2:
        two = [c for c in cands if pos_rows // c >= 2]
        if two:
            best = two[-1]
    return best


def amino_acid_embedding(tokens: jnp.ndarray,
                         emb_table: jnp.ndarray,
                         pos_encoding_full: jnp.ndarray,
                         *,
                         max_tile_rows: int = 4096) -> jnp.ndarray:
    """tokens: (B, S) int32; emb_table: (V, D) f32; pos_encoding_full: (max_len, D) f32."""
    B, S = tokens.shape
    V, D = emb_table.shape
    assert 128 % D == 0, "lane-packed path requires aa_dims dividing 128 (module default 64)"
    pack = 128 // D
    assert S % pack == 0, "lane-packed path requires seq_len divisible by 128 // aa_dims"
    assert V <= 256 and pack <= 4, "token ids are packed one byte each into a single int32"

    pos_rows = S // pack                    # packed rows per batch element
    n_rows = B * pos_rows                   # packed output rows total

    # Packed embedding table: segment p holds emb in lanes [p*D, (p+1)*D).
    # K is fixed at ~pack*V regardless of S (positional rows are NOT in K).
    C = pack * V
    C_pad = _round_up(C, 8)
    tbl = jnp.zeros((C_pad, 128), jnp.float32)
    for p in range(pack):
        tbl = tbl.at[p * V:(p + 1) * V, p * D:(p + 1) * D].set(emb_table)

    # Lane-packed positional rows: (pos_rows, 128), selected per-tile by BlockSpec.
    pos_packed = pos_encoding_full[:S, :].reshape(pos_rows, pack * D)

    # Pack the `pack` token ids of each output row into the low bytes of one int32.
    tok = tokens.reshape(B, pos_rows, pack).astype(jnp.int32)
    tok_packed = jnp.zeros((B, pos_rows), jnp.int32)
    for p in range(pack):
        tok_packed = tok_packed | (tok[:, :, p] << (8 * p))
    tok_packed = tok_packed[:, :, None]     # (B, pos_rows, 1)

    tile_rows = _choose_tile_rows(pos_rows, B, max_tile_rows)
    grid = (B, pos_rows // tile_rows)       # exact division -> unmasked stores only

    kernel = functools.partial(_aa_embed_kernel, vocab=V, pack=pack)

    out_packed = pl.pallas_call(
        kernel,
        out_shape=jax.ShapeDtypeStruct((B, pos_rows, 128), jnp.float32),
        grid=grid,
        in_specs=[
            pl.BlockSpec((1, tile_rows, 1), lambda b, j: (b, j, 0)),    # packed tokens
            pl.BlockSpec((C_pad, 128), lambda b, j: (0, 0)),            # embedding table (resident)
            pl.BlockSpec((tile_rows, 128), lambda b, j: (j, 0)),        # positional rows
        ],
        out_specs=pl.BlockSpec((1, tile_rows, 128), lambda b, j: (b, j, 0)),
        compiler_params=pltpu.CompilerParams(
            dimension_semantics=("parallel", "parallel"),   # megacore / 2-TC sharding
            vmem_limit_bytes=48 * 1024 * 1024,              # explicit for v5e, <= v7x ceiling
        ),
        cost_estimate=pl.CostEstimate(
            flops=2 * n_rows * C_pad * 128 + n_rows * 128,
            transcendentals=0,
            bytes_accessed=(n_rows * 128 * 4            # output writeback
                            + n_rows * 4                # packed tokens
                            + B * pos_rows * 128 * 4    # positional rows
                            + C_pad * 128 * 4),         # embedding table
        ),
    )(tok_packed, tbl, pos_packed)

    # Layout plumbing only: packed (B, pos_rows, 128) slab back to (B, S, D).
    out = out_packed.reshape(B, S, D)
    # Dropout (p=0.1) in eval mode is the identity.
    return out


def reference(tokens, emb_table, pos_encoding_full):
    # Pure-JAX reference of the PyTorch forward (eval mode).
    emb = jnp.take(emb_table, tokens, axis=0)                 # (B, S, D)
    pos = pos_encoding_full[: tokens.shape[1], :][None]       # (1, S, D)
    return emb + pos


if __name__ == "__main__":
    aa_size, aa_dims, pad_token_id, max_len = 21, 64, 0, 30
    B, S = 2, 16

    key = jax.random.PRNGKey(0)
    k_emb, k_tok = jax.random.split(key)

    emb_table = make_embedding_table(k_emb, aa_size, aa_dims, pad_token_id)
    pos_enc = make_positional_encoding(aa_dims, max_len)
    tokens = jax.random.randint(k_tok, (B, S), 0, aa_size, dtype=jnp.int32)

    out = amino_acid_embedding(tokens, emb_table, pos_enc)
    out = jax.block_until_ready(out)

    ref = reference(tokens, emb_table, pos_enc)
    assert out.shape == (B, S, aa_dims)
    assert out.dtype == jnp.float32
    assert jnp.allclose(out, ref, atol=1e-5, rtol=1e-5), "mismatch vs reference"

    print("KERNEL_OK")
</pallas_src>

<mosaic_0001>
module attributes {stable_mosaic.version = 11 : i64} {
  func.func @_aa_embed_kernel(%arg0: i32, %arg1: i32, %arg2: memref<1x8x1xi32, #tpu.memory_space<vmem>>, %arg3: memref<48x128xf32, #tpu.memory_space<vmem>>, %arg4: memref<8x128xf32, #tpu.memory_space<vmem>>, %arg5: memref<1x8x128xf32, #tpu.memory_space<vmem>>) attributes {dimension_semantics = [#tpu.dimension_semantics<parallel>, #tpu.dimension_semantics<parallel>], iteration_bounds = array<i64: 2, 1>, scalar_prefetch = 0 : i64, scratch_operands = 0 : i64, tpu.core_type = #tpu.core_type<tc>, window_params = [{transform_indices = @transform_0, window_bounds = array<i64: 1, 8, 1>}, {pipeline_mode = #tpu.pipeline_mode<synchronous>, transform_indices = @transform_1, window_bounds = array<i64: 48, 128>}, {transform_indices = @transform_2, window_bounds = array<i64: 8, 128>}, {transform_indices = @transform_3, window_bounds = array<i64: 1, 8, 128>}]} {
    %c0 = arith.constant 0 : index
    %c0_0 = arith.constant 0 : index
    %c0_1 = arith.constant 0 : index
    %0 = vector.load %arg2[%c0, %c0_0, %c0_1] : memref<1x8x1xi32, #tpu.memory_space<vmem>>, vector<1x8x1xi32>
    %1 = vector.shape_cast %0 : vector<1x8x1xi32> to vector<8x1xi32>
    %2 = tpu.iota {dimensions = array<i32: 1>} : vector<8x48xi32>
    %c0_i32 = arith.constant 0 : i32
    %3 = vector.broadcast %c0_i32 : i32 to vector<8x1xi32>
    %4 = arith.shrsi %1, %3 : vector<8x1xi32>
    %c255_i32 = arith.constant 255 : i32
    %5 = vector.broadcast %c255_i32 : i32 to vector<8x1xi32>
    %6 = arith.andi %4, %5 : vector<8x1xi32>
    %c0_i32_2 = arith.constant 0 : i32
    %7 = vector.broadcast %c0_i32_2 : i32 to vector<8x1xi32>
    %8 = arith.addi %7, %6 : vector<8x1xi32>
    %9 = vector.broadcast %8 : vector<8x1xi32> to vector<8x48xi32>
    %10 = arith.cmpi eq, %2, %9 : vector<8x48xi32>
    %c8_i32 = arith.constant 8 : i32
    %11 = vector.broadcast %c8_i32 : i32 to vector<8x1xi32>
    %12 = arith.shrsi %1, %11 : vector<8x1xi32>
    %c255_i32_3 = arith.constant 255 : i32
    %13 = vector.broadcast %c255_i32_3 : i32 to vector<8x1xi32>
    %14 = arith.andi %12, %13 : vector<8x1xi32>
    %c21_i32 = arith.constant 21 : i32
    %15 = vector.broadcast %c21_i32 : i32 to vector<8x1xi32>
    %16 = arith.addi %15, %14 : vector<8x1xi32>
    %17 = vector.broadcast %16 : vector<8x1xi32> to vector<8x48xi32>
    %18 = arith.cmpi eq, %2, %17 : vector<8x48xi32>
    %19 = arith.ori %10, %18 : vector<8x48xi1>
    %20 = arith.extui %19 : vector<8x48xi1> to vector<8x48xi32>
    %21 = arith.sitofp %20 : vector<8x48xi32> to vector<8x48xf32>
    %c0_4 = arith.constant 0 : index
    %c0_5 = arith.constant 0 : index
    %22 = vector.load %arg3[%c0_4, %c0_5] : memref<48x128xf32, #tpu.memory_space<vmem>>, vector<48x128xf32>
    %cst = arith.constant dense<0.000000e+00> : vector<8x128xf32>
    %23 = tpu.matmul %21, %22, %cst {dimension_numbers = #tpu.dot_dimension_numbers<[1], [0], [0], [1], [0, 0, 1, 1], [], []>} : vector<8x48xf32>, vector<48x128xf32>, vector<8x128xf32> -> vector<8x128xf32>
    %c0_6 = arith.constant 0 : index
    %c0_7 = arith.constant 0 : index
    %24 = vector.load %arg4[%c0_6, %c0_7] : memref<8x128xf32, #tpu.memory_space<vmem>>, vector<8x128xf32>
    %25 = arith.addf %23, %24 : vector<8x128xf32>
    %c0_8 = arith.constant 0 : index
    %c0_9 = arith.constant 0 : index
    %c0_10 = arith.constant 0 : index
    %26 = vector.load %arg5[%c0_8, %c0_9, %c0_10] : memref<1x8x128xf32, #tpu.memory_space<vmem>>, vector<1x8x128xf32>
    %27 = vector.shape_cast %26 : vector<1x8x128xf32> to vector<8x128xf32>
    %28 = vector.shape_cast %25 : vector<8x128xf32> to vector<1x8x128xf32>
    tpu.vector_store %arg5[%c0_8, %c0_9, %c0_10], %28 {strides = array<i32>} : memref<1x8x128xf32, #tpu.memory_space<vmem>>, vector<1x8x128xf32>,
    return
  }
  func.func @transform_0(%arg0: i32, %arg1: i32) -> (i32, i32, i32) {
    %c0_i32 = arith.constant 0 : i32
    %c0_i32_0 = arith.constant 0 : i32
    return %arg0, %arg1, %c0_i32 : i32, i32, i32
  }
  func.func @transform_1(%arg0: i32, %arg1: i32) -> (i32, i32) {
    %c0_i32 = arith.constant 0 : i32
    %c0_i32_0 = arith.constant 0 : i32
    %c0_i32_1 = arith.constant 0 : i32
    return %c0_i32, %c0_i32_0 : i32, i32
  }
  func.func @transform_2(%arg0: i32, %arg1: i32) -> (i32, i32) {
    %c0_i32 = arith.constant 0 : i32
    %c0_i32_0 = arith.constant 0 : i32
    return %arg1, %c0_i32 : i32, i32
  }
  func.func @transform_3(%arg0: i32, %arg1: i32) -> (i32, i32, i32) {
    %c0_i32 = arith.constant 0 : i32
    %c0_i32_0 = arith.constant 0 : i32
    return %arg0, %arg1, %c0_i32 : i32, i32, i32
  }
}

</mosaic_0001>

<llo_original>
// kernel: tpu_custom_call.1
$region0: #{tpu_custom_call.1}
  #allocation0 [shape = 'u32[]', space=smem, size = 0x4, offset = 0x4, fixed_abs, tag = 'smem constant byte address 0x4 - core index']
  #allocation1 [shape = 'u32[72,128]{1,0:T(1,128)}', space=vmem, size = 0x9000, scoped, tag = 'internal scratch']
  %s0 = inlined_call_operand.vmem [shape: s32[2,8,1], index: 0, kind: input, shape index: {}]
  %s1 = inlined_call_operand.hbm [shape: f32[48,128], index: 1, kind: input, shape index: {}]
  %s2 = inlined_call_operand.vmem [shape: f32[8,128], index: 2, kind: input, shape index: {}]
  %s3 = inlined_call_operand.hbm [shape: f32[2,8,128], index: 3, kind: output, shape index: {}]
  %s4 = sld [smem:[#allocation0]]
  $region49: #{tpu_custom_call.1} parent=0
    _
  %s6 = ssub.s32 1, %s4
  %s7 = scalar_select 0, %s6, %s4
  $region1: #{tpu_custom_call.1} parent=0
    #allocation2 [shape = 'u8[24576]{0}', space=vmem, size = 0x6000, scoped, tag = 'input window, operand 1, single buffered']
    #allocation3 [shape = 's32[2]{0}', space=sflag, size = 0x8, scoped, tag = 'scoped memory for tpu_custom_call.1']
    #allocation4 [shape = 's32[2]{0}', space=sflag, size = 0x8, scoped, tag = 'scoped memory for tpu_custom_call.1']
    #allocation5 [shape = 'u8[8192]{0}', space=vmem, size = 0x2000, scoped, tag = 'output window, operand 0']
    %8 = vsyncpa [#allocation3], 0
    %9 = vsyncpa [#allocation4], 0
    %s10 = scalar_lea.sflag [#allocation4], 1
    %11 = vsyncpa %s10, 0
    loop: start=0, step=1, limit=4
    $region2: #{tpu_custom_call.1} parent=1 // loop_pre_header
      _
    $region3: #{tpu_custom_call.1} parent=1 // loop_header
      %s13 = sphi 0, %s17
      %p14 = scmp.ge.s32.totalorder %s13, 4
      %s20 = sphi 0, %s32
      %s21 = sphi 0, %s28
      %s22 = sphi 0, %s20
      %s23 = sphi 0, %s21
      %s24 = sphi 0, %s22
      %s25 = sphi 0, %s23
      %s37 = sphi 0, %s39
      %s40 = sphi 0, %s37
      %s41 = sphi 0, %s40
      %s57 = sphi 0, %s41
      %s61 = sphi 0, %s61
      %s63 = sphi 0, %s61
      %s64 = sphi 0, %s63
      %s78 = sphi 0, %s64
      %s84 = sphi 0, %s86
      %s87 = sphi 0, %s84
      %s88 = sphi 0, %s87
      %s104 = sphi 0, %s88
      %s112 = sphi 0, %s114
      %s115 = sphi 0, %s112
      %s116 = sphi 0, %s115
      %s132 = sphi 0, %s116
    $region4: #{tpu_custom_call.1} parent=1 // loop_header_branch
      %16 = sbr.rel (%p14) target = $region8
    $region5: #{tpu_custom_call.1} parent=1 // loop_body
      %s18 = ssub.s32 %s13, 1
      %s19 = ssub.s32 %s13, 2
      %s26 = sadd.s32 1, %s21
      %p27 = scmp.ge.s32.totalorder %s26, 1
      %s28 = scalar_select %p27, 0, %s26
      %s29 = sadd.s32 1, %s20
      %s30 = scalar_select %p27, %s29, %s20
      %p31 = scmp.ge.s32.totalorder %s30, 2
      %s32 = scalar_select %p31, 0, %s30
      %s33 = ssub.s32 %s20, %s32
      %s34 = ssub.s32 %s21, %s28
      %s35 = sor.u32 %s33, %s34
      %p36 = scmp.eq.s32.totalorder %s35, 0
      %s38 = sadd.s32 %s37, 1
      %s39 = scalar_select %p36, %s37, %s38
      %p42 = pneg %p36
      %p43 = scmp.eq.s32.totalorder %s13, 1
      %p44 = por %p42, %p43
      %p45 = scmp.ne.s32.totalorder %s37, %s40
      %p46 = scmp.eq.s32.totalorder %s13, 0
      %p47 = por %p45, %p46
      %p48 = scmp.ne.s32.totalorder %s37, %s40
      %p49 = scmp.eq.s32.totalorder %s18, 1
      %p50 = por %p48, %p49
      %p51 = scmp.ne.s32.totalorder %s40, %s41
      %p52 = scmp.eq.s32.totalorder %s18, 0
      %p53 = por %p51, %p52
      %p54 = scmp.ne.s32.totalorder %s40, %s41
      %p55 = scmp.eq.s32.totalorder %s19, 1
      %p56 = por %p54, %p55
      %p58 = scmp.ne.s32.totalorder %s41, %s57
      %p59 = scmp.eq.s32.totalorder %s19, 0
      %p60 = por %p58, %p59
      %s62 = sadd.s32 %s61, 1
      %p65 = scmp.eq.s32.totalorder %s13, 1
      %p66 = scmp.ne.s32.totalorder %s61, %s63
      %p67 = scmp.eq.s32.totalorder %s13, 0
      %p68 = por %p66, %p67
      %p69 = scmp.ne.s32.totalorder %s61, %s63
      %p70 = scmp.eq.s32.totalorder %s18, 1
      %p71 = por %p69, %p70
      %p72 = scmp.ne.s32.totalorder %s63, %s64
      %p73 = scmp.eq.s32.totalorder %s18, 0
      %p74 = por %p72, %p73
      %p75 = scmp.ne.s32.totalorder %s63, %s64
      %p76 = scmp.eq.s32.totalorder %s19, 1
      %p77 = por %p75, %p76
      %p79 = scmp.ne.s32.totalorder %s64, %s78
      %p80 = scmp.eq.s32.totalorder %s19, 0
      %p81 = por %p79, %p80
      %s82 = ssub.s32 %s21, %s28
      %p83 = scmp.eq.s32.totalorder %s82, 0
      %s85 = sadd.s32 %s84, 1
      %s86 = scalar_select %p83, %s84, %s85
      %p89 = pneg %p83
      %p90 = scmp.eq.s32.totalorder %s13, 1
      %p91 = por %p89, %p90
      %p92 = scmp.ne.s32.totalorder %s84, %s87
      %p93 = scmp.eq.s32.totalorder %s13, 0
      %p94 = por %p92, %p93
      %p95 = scmp.ne.s32.totalorder %s84, %s87
      %p96 = scmp.eq.s32.totalorder %s18, 1
      %p97 = por %p95, %p96
      %p98 = scmp.ne.s32.totalorder %s87, %s88
      %p99 = scmp.eq.s32.totalorder %s18, 0
      %p100 = por %p98, %p99
      %p101 = scmp.ne.s32.totalorder %s87, %s88
      %p102 = scmp.eq.s32.totalorder %s19, 1
      %p103 = por %p101, %p102
      %p105 = scmp.ne.s32.totalorder %s88, %s104
      %p106 = scmp.eq.s32.totalorder %s19, 0
      %p107 = por %p105, %p106
      %s108 = ssub.s32 %s20, %s32
      %s109 = ssub.s32 %s21, %s28
      %s110 = sor.u32 %s108, %s109
      %p111 = scmp.eq.s32.totalorder %s110, 0
      %s113 = sadd.s32 %s112, 1
      %s114 = scalar_select %p111, %s112, %s113
      %p117 = pneg %p111
      %p118 = scmp.eq.s32.totalorder %s13, 1
      %p119 = por %p117, %p118
      %p120 = scmp.ne.s32.totalorder %s112, %s115
      %p121 = scmp.eq.s32.totalorder %s13, 0
      %p122 = por %p120, %p121
      %p123 = scmp.ne.s32.totalorder %s112, %s115
      %p124 = scmp.eq.s32.totalorder %s18, 1
      %p125 = por %p123, %p124
      %p126 = scmp.ne.s32.totalorder %s115, %s116
      %p127 = scmp.eq.s32.totalorder %s18, 0
      %p128 = por %p126, %p127
      %p129 = scmp.ne.s32.totalorder %s115, %s116
      %p130 = scmp.eq.s32.totalorder %s19, 1
      %p131 = por %p129, %p130
      %p133 = scmp.ne.s32.totalorder %s116, %s132
      %p134 = scmp.eq.s32.totalorder %s19, 0
      %p135 = por %p133, %p134
      %p136 = scmp.le.s32.totalorder 1, %s13
      %p137 = scmp.lt.s32.totalorder %s13, 3
      %p138 = pnand %p136, %p137
      %p139 = pneg %p138
      // Predicated region
      $region9: #{tpu_custom_call.1} parent=5 // pred_check
        _
      $region10: #{tpu_custom_call.1} parent=5 // pred_check_branch
        %141 = sbr.rel (%p138) target = $region12
      $region11: #{tpu_custom_call.1} parent=5 // pred_region
        %s142 = ssub.s32 %s13, 1
        // Predicated region
        $region13: #{tpu_custom_call.1} parent=11 // pred_check
          %p143 = pneg %p74
        $region14: #{tpu_custom_call.1} parent=11 // pred_check_branch
          %145 = sbr.rel (%p143) target = $region16
        $region15: #{tpu_custom_call.1} parent=11 // pred_region
          %147 = vsyncadd [#allocation3], 0
          %s148 = sshll.u32 %s1, 4
          %s149 = int_to_ptr.hbm [resolvable:$true] %s148
          %s150 = sshll.u32 [#allocation2], 4
          %s151 = int_to_ptr.vmem [resolvable:$true] %s150
          %156 = dma.hbm_to_vmem [thread:$0]  %s149, 768, %s151, [#allocation3], 128, 128, 8
        $region16: #{tpu_custom_call.1} parent=11 // pred_fallthru
          _
        // Predicated region
        $region17: #{tpu_custom_call.1} parent=11 // pred_check
          %p157 = pneg %p100
        $region18: #{tpu_custom_call.1} parent=11 // pred_check_branch
          %159 = sbr.rel (%p157) target = $region20
        $region19: #{tpu_custom_call.1} parent=11 // pred_region
          %p160 = scmp.lt.s32.totalorder %s23, 0
          %s161 = scalar_select %p160, %s23, 0
          %s162 = smul.addr %s161, 8
          %s163 = scalar_lea.vmem %s2, %s162
        $region20: #{tpu_custom_call.1} parent=11 // pred_fallthru
          _
      $region12: #{tpu_custom_call.1} parent=5 // pred_fallthru
        _
      %p164 = scmp.lt.s32.totalorder %s13, 2
      // Predicated region
      $region21: #{tpu_custom_call.1} parent=5 // pred_check
        %p165 = pneg %p164
      $region22: #{tpu_custom_call.1} parent=5 // pred_check_branch
        %167 = sbr.rel (%p165) target = $region24
      $region23: #{tpu_custom_call.1} parent=5 // pred_region
        // Predicated region
        $region25: #{tpu_custom_call.1} parent=23 // pred_check
          %p168 = pneg %p47
        $region26: #{tpu_custom_call.1} parent=23 // pred_check_branch
          %170 = sbr.rel (%p168) target = $region28
        $region27: #{tpu_custom_call.1} parent=23 // pred_region
          %p171 = scmp.lt.s32.totalorder %s20, 1
          %s172 = scalar_select %p171, %s20, 1
          %p173 = scmp.lt.s32.totalorder %s21, 0
          %s174 = scalar_select %p173, %s21, 0
          %s175 = sadd.s32 %s174, %s172
          %s176 = smul.addr %s175, 8
          %s177 = scalar_lea.vmem %s0, %s176
        $region28: #{tpu_custom_call.1} parent=23 // pred_fallthru
          _
      $region24: #{tpu_custom_call.1} parent=5 // pred_fallthru
        _
      %p178 = scmp.le.s32.totalorder 1, %s13
      %p179 = scmp.lt.s32.totalorder %s13, 3
      %p180 = pnand %p178, %p179
      %p181 = pneg %p180
      // Predicated region
      $region29: #{tpu_custom_call.1} parent=5 // pred_check
        _
      $region30: #{tpu_custom_call.1} parent=5 // pred_check_branch
        %183 = sbr.rel (%p180) target = $region32
      $region31: #{tpu_custom_call.1} parent=5 // pred_region
        %s184 = ssub.s32 %s13, 1
        // Predicated region
        $region33: #{tpu_custom_call.1} parent=31 // pred_check
          %p185 = pneg %p74
        $region34: #{tpu_custom_call.1} parent=31 // pred_check_branch
          %187 = sbr.rel (%p185) target = $region36
        $region35: #{tpu_custom_call.1} parent=31 // pred_region
          %189 = dma.done [#allocation3], 768
        $region36: #{tpu_custom_call.1} parent=31 // pred_fallthru
          _
        %p190 = scmp.lt.s32.totalorder %s22, 1
        %s191 = scalar_select %p190, %s22, 1
        %p192 = scmp.lt.s32.totalorder %s23, 0
        %s193 = scalar_select %p192, %s23, 0
        %s194 = sadd.s32 %s193, %s191
        %s195 = smul.addr %s194, 8
        %s196 = scalar_lea.vmem %s0, %s195
        %p197 = pneg %p53
        %p198 = pneg %p50
        %p199 = pneg %p74
        %p200 = pneg %p71
        %p201 = scmp.lt.s32.totalorder %s23, 0
        %s202 = scalar_select %p201, %s23, 0
        %s203 = smul.addr %s202, 8
        %s204 = scalar_lea.vmem %s2, %s203
        %p205 = pneg %p100
        %p206 = pneg %p97
        %p207 = pneg %p128
        %p208 = pneg %p125
        %s209 = sand.u32 %s115, 1
        %s210 = scalar_lea.sflag [#allocation4], %s209
        %s211 = sand.u32 %s115, 1
        %s212 = smul.addr %s211, 8
        %s213 = scalar_lea.vmem [#allocation5], %s212
        %p214 = scmp.lt.s32.totalorder %s22, 1
        %s215 = scalar_select %p214, %s22, 1
        %p216 = scmp.lt.s32.totalorder %s23, 0
        %s217 = scalar_select %p216, %s23, 0
        %s218 = sadd.s32 %s217, %s215
        %s219 = smul.addr %s218, 8
        %s220 = scalar_lea.vmem %s0, %s219
        %p221 = scmp.lt.s32.totalorder %s23, 0
        %s222 = scalar_select %p221, %s23, 0
        %s223 = smul.addr %s222, 8
        %s224 = scalar_lea.vmem %s2, %s223
        %v225 = vld [vmem:[%s220] sm:$0xff]
        %v226 = vlaneseq
        %v227 = vand.u32 %v226, 127
        %v228 = vand.u32 %v225, 255
        %229 = vset.pattern.permute.xlu0 0
        %230 = vperm.xlu0 %229, %v228
        %v231 = vpop.permute.xlu0 %230
        %vm232 = vcmp.eq.s32.totalorder %v227, %v231
        %v233 = vshra.s32 %v225, 8
        %v234 = vand.u32 %v233, 255
        %v235 = vadd.s32 %v234, 21
        %236 = vset.pattern.permute.xlu0 0
        %237 = vperm.xlu0 %236, %v235
        %v238 = vpop.permute.xlu0 %237
        %vm239 = vcmp.eq.s32.totalorder %v227, %v238
        %vm240 = vmor %vm232, %vm239
        %v241 = vsel %vm240, 1, 0
        %v242 = vcvt.s32.f32 %v241
        %v243 = vld [vmem:[#allocation2] sm:$0xff]
        %v244 = vld [vmem:[#allocation2 + $0x8] sm:$0xff]
        %v245 = vld [vmem:[#allocation2 + $0x10] sm:$0xff]
        %v246 = vld [vmem:[#allocation2 + $0x18] sm:$0xff]
        %v247 = vld [vmem:[#allocation2 + $0x20] sm:$0xff]
        %v248 = vld [vmem:[#allocation2 + $0x28] sm:$0xff]
        %v249 = vld [vmem:[%s224] sm:$0xff]
        %vm250 = vcmask 392192
        %v252 = vsel %vm250, %v242, 0
        %254 = vmatpush.msra.mxu0 0.0
        %255 = vmatpush.msra.mxu0 0.0
        %256 = vmatpush.msra.mxu0 0.0
        %257 = vmatpush.msra.mxu0 0.0
        %258 = vmatpush.msra.mxu0 0.0
        %259 = vmatpush.msra.mxu0 0.0
        %260 = vmatpush.msra.mxu0 0.0
        %261 = vmatpush.msra.mxu0 0.0
        %262 = vmatpush.msra.mxu0 0.0
        %263 = vmatpush.msra.mxu0 0.0
        %264 = vmatpush.msra.mxu0 %v248
        %265 = vmatpush.msra.mxu0 %v247
        %266 = vmatpush.msra.mxu0 %v246
        %267 = vmatpush.msra.mxu0 %v245
        %268 = vmatpush.msra.mxu0 %v244
        %269 = vmatpush.msra.mxu0 %v243
        %270 = vmatmul.f32.gmra.mxu0 %v252
        %v271 = vpop.f32.mrf.mxu0
        %v272 = vadd.f32 %v249, %v271
        %273 = vdwg.mxu0
        %274 = vst [vmem:[%s213] sm:$0xff] %v272
        %s275 = sand.u32 %s115, 1
        %s276 = scalar_lea.sflag [#allocation4], %s275
        %s277 = sand.u32 %s115, 1
        %s278 = smul.addr %s277, 8
        %s279 = scalar_lea.vmem [#allocation5], %s278
        // Predicated region
        $region37: #{tpu_custom_call.1} parent=31 // pred_check
          %p280 = pneg %p125
        $region38: #{tpu_custom_call.1} parent=31 // pred_check_branch
          %282 = sbr.rel (%p280) target = $region40
        $region39: #{tpu_custom_call.1} parent=31 // pred_region
          %284 = vsyncadd %s276, 0
          %s285 = sadd.s32 %s23, %s22
          %s286 = smul.addr %s285, 8
          %s287 = scalar_lea.hbm %s3, %s286
          %s289 = sshll.u32 %s279, 4
          %s290 = int_to_ptr.vmem [resolvable:$true] %s289
          %s291 = sshll.u32 %s287, 4
          %s292 = int_to_ptr.hbm [resolvable:$true] %s291
          %294 = dma.vmem_to_hbm [thread:$0]  %s290, 128, %s292, %s276
        $region40: #{tpu_custom_call.1} parent=31 // pred_fallthru
          _
      $region32: #{tpu_custom_call.1} parent=5 // pred_fallthru
        _
      %p295 = scmp.le.s32.totalorder 2, %s13
      // Predicated region
      $region41: #{tpu_custom_call.1} parent=5 // pred_check
        %p296 = pneg %p295
      $region42: #{tpu_custom_call.1} parent=5 // pred_check_branch
        %298 = sbr.rel (%p296) target = $region44
      $region43: #{tpu_custom_call.1} parent=5 // pred_region
        %s299 = ssub.s32 %s13, 2
        // Predicated region
        $region45: #{tpu_custom_call.1} parent=43 // pred_check
          %p300 = pneg %p131
        $region46: #{tpu_custom_call.1} parent=43 // pred_check_branch
          %302 = sbr.rel (%p300) target = $region48
        $region47: #{tpu_custom_call.1} parent=43 // pred_region
          %s303 = sand.u32 %s116, 1
          %s304 = scalar_lea.sflag [#allocation4], %s303
          %s305 = sand.u32 %s116, 1
          %s306 = smul.addr %s305, 8
          %s307 = scalar_lea.vmem [#allocation5], %s306
          %309 = dma.done %s304, 128
        $region48: #{tpu_custom_call.1} parent=43 // pred_fallthru
          _
      $region44: #{tpu_custom_call.1} parent=5 // pred_fallthru
        _
    $region6: #{tpu_custom_call.1} parent=1 // loop_footer
      %s17 = sadd.s32 1, %s13
    $region7: #{tpu_custom_call.1} parent=1 // loop_footer_branch
      %12 = sbr.rel target = $region3
    $region8: #{tpu_custom_call.1} parent=1 // loop_exit
      _
    %310 = vsyncpa [#allocation3], 1
    %s311 = scalar_lea.sflag [#allocation3], 1
    %312 = vsyncpa %s311, 1
    %313 = vsyncpa [#allocation4], 1
    %s314 = scalar_lea.sflag [#allocation4], 1
    %315 = vsyncpa %s314, 1

</llo_original>
